<compile_context>
chip_gen: v7x
topology: tpu7x:2x2x1
jax: 0.10.0
libtpu: 0.0.40
codegen_flags: <defaults>
</compile_context>

<pallas_src>
import jax
import jax.numpy as jnp
from jax.experimental import pallas as pl
from jax.experimental.pallas import tpu as pltpu


def _round_up(x: int, m: int) -> int:
    return ((x + m - 1) // m) * m


def critic_kernel(x_ref, w1_ref, w2_ref, b_ref, wq_ref, bq_ref, o_ref):
    # fc1: one K=(state_dim+action_dim) bf16 matmul, f32 accumulate, + bias, ReLU
    x = x_ref[...].astype(jnp.bfloat16)
    h1 = jnp.dot(x, w1_ref[...], preferred_element_type=jnp.float32)
    h1 = jnp.maximum(h1 + b_ref[0:1, :], 0.0)

    # fc2: bf16 operands, f32 accumulate, + bias, ReLU
    h2 = jnp.dot(h1.astype(jnp.bfloat16), w2_ref[...],
                 preferred_element_type=jnp.float32)
    h2 = jnp.maximum(h2 + b_ref[1:2, :], 0.0)

    # q head: (1, H) @ (H, TB) -> (1, TB) lane-dense row (f32), + scalar bias from SMEM
    q_row = jnp.dot(wq_ref[...], h2.T, preferred_element_type=jnp.float32)
    o_ref[...] = (q_row + bq_ref[0]).astype(o_ref.dtype)


def critic_forward(state, action, params, *, max_batch_tile: int = 256):
    """state: (B, state_dim), action: (B, action_dim) -> (B, 1)"""
    w1, w2, biases, wq, bq = params
    B = state.shape[0]

    # Fused fc1 input (concat cost is ~KBs here and drops one kernel operand).
    x = jnp.concatenate([state, action], axis=-1).astype(jnp.float32)
    feat = x.shape[1]

    # Batch tile: multiple of 128 (lane-dense output row), capped; pad batch to tile.
    max_batch_tile = max(128, _round_up(max_batch_tile, 128))
    TB = min(max_batch_tile, _round_up(B, 128))
    B_pad = _round_up(B, TB)
    if B_pad != B:
        x = jnp.pad(x, ((0, B_pad - B), (0, 0)))

    grid = (B_pad // TB,)

    def resident(arr):
        # Full-array block, constant index -> stays resident in VMEM across grid steps.
        return pl.BlockSpec(arr.shape, lambda i: tuple(0 for _ in arr.shape))

    out = pl.pallas_call(
        critic_kernel,
        out_shape=jax.ShapeDtypeStruct((1, B_pad), jnp.float32),
        grid=grid,
        in_specs=[
            pl.BlockSpec((TB, feat), lambda i: (i, 0)),           # x tile
            resident(w1),                                          # (feat, H) bf16
            resident(w2),                                          # (H, H) bf16
            resident(biases),                                      # (2, H) f32
            resident(wq),                                          # (1, H) f32
            pl.BlockSpec(memory_space=pltpu.MemorySpace.SMEM),     # bq scalar
        ],
        out_specs=pl.BlockSpec((1, TB), lambda i: (0, i)),         # lane-dense row
        compiler_params=pltpu.CompilerParams(
            dimension_semantics=("parallel",)),
    )(x, w1, w2, biases, wq, bq)

    # (1, B_pad) row -> (B, 1) column; padded rows discarded.
    return out.reshape(B_pad, 1)[:B]


def init_params(key, state_dim, action_dim, hidden_dim):
    """PyTorch-style uniform(-1/sqrt(fan_in), 1/sqrt(fan_in)) init.
    Weights of the two MXU matmuls stored bf16; biases / q-head weight stay f32."""
    kw1, kb1, kw2, kb2, kwq, kbq = jax.random.split(key, 6)
    fan1 = state_dim + action_dim
    bnd1 = 1.0 / (fan1 ** 0.5)
    bnd2 = 1.0 / (hidden_dim ** 0.5)

    w1 = jax.random.uniform(kw1, (fan1, hidden_dim), jnp.float32,
                            -bnd1, bnd1).astype(jnp.bfloat16)
    b1 = jax.random.uniform(kb1, (hidden_dim,), jnp.float32, -bnd1, bnd1)
    w2 = jax.random.uniform(kw2, (hidden_dim, hidden_dim), jnp.float32,
                            -bnd2, bnd2).astype(jnp.bfloat16)
    b2 = jax.random.uniform(kb2, (hidden_dim,), jnp.float32, -bnd2, bnd2)
    wq = jax.random.uniform(kwq, (1, hidden_dim), jnp.float32, -bnd2, bnd2)
    bq = jax.random.uniform(kbq, (1,), jnp.float32, -bnd2, bnd2)

    biases = jnp.stack([b1, b2], axis=0)  # (2, hidden): row 0 = b1, row 1 = b2
    return (w1, w2, biases, wq, bq)


def critic_reference(state, action, params):
    """Pure-JAX reference of the PyTorch Critic forward, with the same bf16 operand
    casts (f32 accumulation) so the correctness check stays meaningful."""
    w1, w2, biases, wq, bq = params
    x = jnp.concatenate([state, action], axis=-1).astype(jnp.bfloat16)
    h1 = jnp.maximum(
        jnp.dot(x, w1, preferred_element_type=jnp.float32) + biases[0:1, :], 0.0)
    h2 = jnp.maximum(
        jnp.dot(h1.astype(jnp.bfloat16), w2,
                preferred_element_type=jnp.float32) + biases[1:2, :], 0.0)
    return jnp.dot(h2, wq.T) + bq[0]


if __name__ == "__main__":
    # B=200 exercises the pad-to-256 single-grid-step path; hidden_dim=128 keeps the
    # matmuls and the output row lane-dense.
    B, state_dim, action_dim, hidden_dim = 200, 16, 16, 128

    key = jax.random.PRNGKey(0)
    k_state, k_action, k_params = jax.random.split(key, 3)

    state = jax.random.normal(k_state, (B, state_dim), jnp.float32)
    action = jax.random.normal(k_action, (B, action_dim), jnp.float32)
    params = init_params(k_params, state_dim, action_dim, hidden_dim)

    out = jax.block_until_ready(critic_forward(state, action, params))
    ref = critic_reference(state, action, params)

    assert out.shape == (B, 1)
    max_err = float(jnp.max(jnp.abs(out - ref)))
    assert jnp.allclose(out, ref, atol=2e-3, rtol=2e-3), f"max_err={max_err}"

    print("KERNEL_OK")
</pallas_src>

<mosaic_0001>
module attributes {stable_mosaic.version = 11 : i64} {
  func.func @critic_kernel(%arg0: i32, %arg1: memref<256x32xf32, #tpu.memory_space<vmem>>, %arg2: memref<32x128xbf16, #tpu.memory_space<vmem>>, %arg3: memref<128x128xbf16, #tpu.memory_space<vmem>>, %arg4: memref<2x128xf32, #tpu.memory_space<vmem>>, %arg5: memref<1x128xf32, #tpu.memory_space<vmem>>, %arg6: memref<1xf32, #tpu.memory_space<smem>>, %arg7: memref<1x256xf32, #tpu.memory_space<vmem>>) attributes {dimension_semantics = [#tpu.dimension_semantics<parallel>], iteration_bounds = array<i64: 1>, scalar_prefetch = 0 : i64, scratch_operands = 0 : i64, tpu.core_type = #tpu.core_type<tc>, window_params = [{transform_indices = @transform_0, window_bounds = array<i64: 256, 32>}, {pipeline_mode = #tpu.pipeline_mode<synchronous>, transform_indices = @transform_1, window_bounds = array<i64: 32, 128>}, {pipeline_mode = #tpu.pipeline_mode<synchronous>, transform_indices = @transform_2, window_bounds = array<i64: 128, 128>}, {pipeline_mode = #tpu.pipeline_mode<synchronous>, transform_indices = @transform_3, window_bounds = array<i64: 2, 128>}, {pipeline_mode = #tpu.pipeline_mode<synchronous>, transform_indices = @transform_4, window_bounds = array<i64: 1, 128>}, {transform_indices = @transform_5, window_bounds = array<i64: 1>}, {transform_indices = @transform_6, window_bounds = array<i64: 1, 256>}]} {
    %c0 = arith.constant 0 : index
    %c0_0 = arith.constant 0 : index
    %0 = vector.load %arg1[%c0, %c0_0] : memref<256x32xf32, #tpu.memory_space<vmem>>, vector<256x32xf32>
    %1 = arith.truncf %0 : vector<256x32xf32> to vector<256x32xbf16>
    %c0_1 = arith.constant 0 : index
    %c0_2 = arith.constant 0 : index
    %2 = vector.load %arg2[%c0_1, %c0_2] : memref<32x128xbf16, #tpu.memory_space<vmem>>, vector<32x128xbf16>
    %cst = arith.constant dense<0.000000e+00> : vector<256x128xf32>
    %3 = tpu.matmul %1, %2, %cst {dimension_numbers = #tpu.dot_dimension_numbers<[1], [0], [0], [1], [0, 0, 1, 1], [], []>} : vector<256x32xbf16>, vector<32x128xbf16>, vector<256x128xf32> -> vector<256x128xf32>
    %c0_3 = arith.constant 0 : index
    %c0_4 = arith.constant 0 : index
    %4 = vector.load %arg4[%c0_3, %c0_4] : memref<2x128xf32, #tpu.memory_space<vmem>>, vector<1x128xf32>
    %5 = vector.broadcast %4 : vector<1x128xf32> to vector<256x128xf32>
    %6 = arith.addf %3, %5 : vector<256x128xf32>
    %cst_5 = arith.constant 0.000000e+00 : f32
    %7 = vector.broadcast %cst_5 : f32 to vector<256x128xf32>
    %8 = arith.maximumf %6, %7 : vector<256x128xf32>
    %9 = arith.truncf %8 : vector<256x128xf32> to vector<256x128xbf16>
    %c0_6 = arith.constant 0 : index
    %c0_7 = arith.constant 0 : index
    %10 = vector.load %arg3[%c0_6, %c0_7] : memref<128x128xbf16, #tpu.memory_space<vmem>>, vector<128x128xbf16>
    %cst_8 = arith.constant dense<0.000000e+00> : vector<256x128xf32>
    %11 = tpu.matmul %9, %10, %cst_8 {dimension_numbers = #tpu.dot_dimension_numbers<[1], [0], [0], [1], [0, 0, 1, 1], [], []>} : vector<256x128xbf16>, vector<128x128xbf16>, vector<256x128xf32> -> vector<256x128xf32>
    %c1 = arith.constant 1 : index
    %c0_9 = arith.constant 0 : index
    %12 = vector.load %arg4[%c1, %c0_9] : memref<2x128xf32, #tpu.memory_space<vmem>>, vector<1x128xf32>
    %13 = vector.broadcast %12 : vector<1x128xf32> to vector<256x128xf32>
    %14 = arith.addf %11, %13 : vector<256x128xf32>
    %cst_10 = arith.constant 0.000000e+00 : f32
    %15 = vector.broadcast %cst_10 : f32 to vector<256x128xf32>
    %16 = arith.maximumf %14, %15 : vector<256x128xf32>
    %c0_11 = arith.constant 0 : index
    %c0_12 = arith.constant 0 : index
    %17 = vector.load %arg5[%c0_11, %c0_12] : memref<1x128xf32, #tpu.memory_space<vmem>>, vector<1x128xf32>
    %18 = tpu.transpose %16, [1, 0] : vector<256x128xf32> -> vector<128x256xf32>
    %cst_13 = arith.constant dense<0.000000e+00> : vector<1x256xf32>
    %19 = tpu.matmul %17, %18, %cst_13 {dimension_numbers = #tpu.dot_dimension_numbers<[1], [0], [0], [1], [0, 0, 1, 1], [], []>} : vector<1x128xf32>, vector<128x256xf32>, vector<1x256xf32> -> vector<1x256xf32>
    %c0_14 = arith.constant 0 : index
    %20 = memref.load %arg6[%c0_14] : memref<1xf32, #tpu.memory_space<smem>>
    %21 = vector.broadcast %20 : f32 to vector<1x256xf32>
    %22 = arith.addf %19, %21 : vector<1x256xf32>
    %c0_15 = arith.constant 0 : index
    %c0_16 = arith.constant 0 : index
    %23 = vector.load %arg7[%c0_15, %c0_16] : memref<1x256xf32, #tpu.memory_space<vmem>>, vector<1x256xf32>
    tpu.vector_store %arg7[%c0_15, %c0_16], %22 {strides = array<i32>} : memref<1x256xf32, #tpu.memory_space<vmem>>, vector<1x256xf32>,
    return
  }
  func.func @transform_0(%arg0: i32) -> (i32, i32) {
    %c0_i32 = arith.constant 0 : i32
    %c0_i32_0 = arith.constant 0 : i32
    return %arg0, %c0_i32 : i32, i32
  }
  func.func @transform_1(%arg0: i32) -> (i32, i32) {
    %c0_i32 = arith.constant 0 : i32
    %c0_i32_0 = arith.constant 0 : i32
    %c0_i32_1 = arith.constant 0 : i32
    return %c0_i32, %c0_i32_0 : i32, i32
  }
  func.func @transform_2(%arg0: i32) -> (i32, i32) {
    %c0_i32 = arith.constant 0 : i32
    %c0_i32_0 = arith.constant 0 : i32
    %c0_i32_1 = arith.constant 0 : i32
    return %c0_i32, %c0_i32_0 : i32, i32
  }
  func.func @transform_3(%arg0: i32) -> (i32, i32) {
    %c0_i32 = arith.constant 0 : i32
    %c0_i32_0 = arith.constant 0 : i32
    %c0_i32_1 = arith.constant 0 : i32
    return %c0_i32, %c0_i32_0 : i32, i32
  }
  func.func @transform_4(%arg0: i32) -> (i32, i32) {
    %c0_i32 = arith.constant 0 : i32
    %c0_i32_0 = arith.constant 0 : i32
    %c0_i32_1 = arith.constant 0 : i32
    return %c0_i32, %c0_i32_0 : i32, i32
  }
  func.func @transform_5(%arg0: i32) -> i32 {
    %c0_i32 = arith.constant 0 : i32
    %c0_i32_0 = arith.constant 0 : i32
    return %c0_i32 : i32
  }
  func.func @transform_6(%arg0: i32) -> (i32, i32) {
    %c0_i32 = arith.constant 0 : i32
    %c0_i32_0 = arith.constant 0 : i32
    return %c0_i32, %arg0 : i32, i32
  }
}

</mosaic_0001>

<llo_original>
// kernel: tpu_custom_call.1
$region0: #{tpu_custom_call.1}
  #allocation0 [shape = 'u32[]', space=smem, size = 0x4, offset = 0x4, fixed_abs, tag = 'smem constant byte address 0x4 - core index']
  #allocation1 [shape = 'u32[144,128]{1,0:T(1,128)}', space=vmem, size = 0x12000, scoped, tag = 'internal scratch']
  #allocation2 [shape = 'f32[1]{0:T(128)S(6)}', space=smem, size = 0x200, scoped, tag = 'scoped memory for tpu_custom_call.1']
  %s0 = inlined_call_operand.vmem [shape: f32[256,32], index: 0, kind: input, shape index: {}]
  %s1 = inlined_call_operand.vmem [shape: bf16[32,128], index: 1, kind: input, shape index: {}]
  %s2 = inlined_call_operand.vmem [shape: bf16[128,128], index: 2, kind: input, shape index: {}]
  %s3 = inlined_call_operand.vmem [shape: f32[2,128], index: 3, kind: input, shape index: {}]
  %s4 = inlined_call_operand.vmem [shape: f32[1,128], index: 4, kind: input, shape index: {}]
  %s5 = inlined_call_operand.<no memory space> [shape: f32[1], index: 5, kind: input, shape index: {}]
  %s6 = inlined_call_operand.hbm [shape: f32[1,256], index: 6, kind: output, shape index: {}]
  %s7 = sld [smem:[#allocation0]]
  $region34: #{tpu_custom_call.1} parent=0
    _
  %s9 = ssub.s32 1, %s7
  %s10 = scalar_select 0, %s9, %s7
  %11 = sst [smem:[#allocation2]] %s5
  $region1: #{tpu_custom_call.1} parent=0
    #allocation3 [shape = 'u8[1024]{0}', space=vmem, size = 0x400, scoped, tag = 'output window, operand 0, single buffered']
    #allocation4 [shape = 's32[1]{0}', space=sflag, size = 0x4, scoped, tag = 'scoped memory for tpu_custom_call.1']
    %12 = vsyncpa [#allocation4], 0
    // Predicated region
    $region2: #{tpu_custom_call.1} parent=1 // pred_check
      _
    $region3: #{tpu_custom_call.1} parent=1 // pred_check_branch
      %14 = sbr.rel (0) target = $region5
    $region4: #{tpu_custom_call.1} parent=1 // pred_region
      _
    $region5: #{tpu_custom_call.1} parent=1 // pred_fallthru
      _
    // Predicated region
    $region6: #{tpu_custom_call.1} parent=1 // pred_check
      _
    $region7: #{tpu_custom_call.1} parent=1 // pred_check_branch
      %16 = sbr.rel (0) target = $region9
    $region8: #{tpu_custom_call.1} parent=1 // pred_region
      _
    $region9: #{tpu_custom_call.1} parent=1 // pred_fallthru
      _
    // Predicated region
    $region10: #{tpu_custom_call.1} parent=1 // pred_check
      _
    $region11: #{tpu_custom_call.1} parent=1 // pred_check_branch
      %18 = sbr.rel (0) target = $region13
    $region12: #{tpu_custom_call.1} parent=1 // pred_region
      _
    $region13: #{tpu_custom_call.1} parent=1 // pred_fallthru
      _
    // Predicated region
    $region14: #{tpu_custom_call.1} parent=1 // pred_check
      _
    $region15: #{tpu_custom_call.1} parent=1 // pred_check_branch
      %20 = sbr.rel (0) target = $region17
    $region16: #{tpu_custom_call.1} parent=1 // pred_region
      _
    $region17: #{tpu_custom_call.1} parent=1 // pred_fallthru
      _
    // Predicated region
    $region18: #{tpu_custom_call.1} parent=1 // pred_check
      _
    $region19: #{tpu_custom_call.1} parent=1 // pred_check_branch
      %22 = sbr.rel (0) target = $region21
    $region20: #{tpu_custom_call.1} parent=1 // pred_region
      _
    $region21: #{tpu_custom_call.1} parent=1 // pred_fallthru
      _
    // Predicated region
    $region22: #{tpu_custom_call.1} parent=1 // pred_check
      _
    $region23: #{tpu_custom_call.1} parent=1 // pred_check_branch
      %24 = sbr.rel (0) target = $region25
    $region24: #{tpu_custom_call.1} parent=1 // pred_region
      _
    $region25: #{tpu_custom_call.1} parent=1 // pred_fallthru
      _
    %v26 = vld [vmem:[%s0] sm:$0xff]
    %v27 = vld [vmem:[%s0 + $0x8] sm:$0xff]
    %v28 = vld [vmem:[%s0 + $0x10] sm:$0xff]
    %v29 = vld [vmem:[%s0 + $0x18] sm:$0xff]
    %v30 = vld [vmem:[%s0 + $0x20] sm:$0xff]
    %v31 = vld [vmem:[%s0 + $0x28] sm:$0xff]
    %v32 = vld [vmem:[%s0 + $0x30] sm:$0xff]
    %v33 = vld [vmem:[%s0 + $0x38] sm:$0xff]
    %v34 = vld [vmem:[%s0 + $0x40] sm:$0xff]
    %v35 = vld [vmem:[%s0 + $0x48] sm:$0xff]
    %v36 = vld [vmem:[%s0 + $0x50] sm:$0xff]
    %v37 = vld [vmem:[%s0 + $0x58] sm:$0xff]
    %v38 = vld [vmem:[%s0 + $0x60] sm:$0xff]
    %v39 = vld [vmem:[%s0 + $0x68] sm:$0xff]
    %v40 = vld [vmem:[%s0 + $0x70] sm:$0xff]
    %v41 = vld [vmem:[%s0 + $0x78] sm:$0xff]
    %v42 = vld [vmem:[%s0 + $0x80] sm:$0xff]
    %v43 = vld [vmem:[%s0 + $0x88] sm:$0xff]
    %v44 = vld [vmem:[%s0 + $0x90] sm:$0xff]
    %v45 = vld [vmem:[%s0 + $0x98] sm:$0xff]
    %v46 = vld [vmem:[%s0 + $0xa0] sm:$0xff]
    %v47 = vld [vmem:[%s0 + $0xa8] sm:$0xff]
    %v48 = vld [vmem:[%s0 + $0xb0] sm:$0xff]
    %v49 = vld [vmem:[%s0 + $0xb8] sm:$0xff]
    %v50 = vld [vmem:[%s0 + $0xc0] sm:$0xff]
    %v51 = vld [vmem:[%s0 + $0xc8] sm:$0xff]
    %v52 = vld [vmem:[%s0 + $0xd0] sm:$0xff]
    %v53 = vld [vmem:[%s0 + $0xd8] sm:$0xff]
    %v54 = vld [vmem:[%s0 + $0xe0] sm:$0xff]
    %v55 = vld [vmem:[%s0 + $0xe8] sm:$0xff]
    %v56 = vld [vmem:[%s0 + $0xf0] sm:$0xff]
    %v57 = vld [vmem:[%s0 + $0xf8] sm:$0xff]
    %v58 = vpack.c.bf16 %v27, %v26
    %v59 = vpack.c.bf16 %v29, %v28
    %v60 = vpack.c.bf16 %v31, %v30
    %v61 = vpack.c.bf16 %v33, %v32
    %v62 = vpack.c.bf16 %v35, %v34
    %v63 = vpack.c.bf16 %v37, %v36
    %v64 = vpack.c.bf16 %v39, %v38
    %v65 = vpack.c.bf16 %v41, %v40
    %v66 = vpack.c.bf16 %v43, %v42
    %v67 = vpack.c.bf16 %v45, %v44
    %v68 = vpack.c.bf16 %v47, %v46
    %v69 = vpack.c.bf16 %v49, %v48
    %v70 = vpack.c.bf16 %v51, %v50
    %v71 = vpack.c.bf16 %v53, %v52
    %v72 = vpack.c.bf16 %v55, %v54
    %v73 = vpack.c.bf16 %v57, %v56
    %v74 = vld [vmem:[%s1] sm:$0xf]
    %v75 = vld [vmem:[%s1 + $0x4] sm:$0xf]
    %v76 = vld [vmem:[%s1 + $0x8] sm:$0xf]
    %v77 = vld [vmem:[%s1 + $0xc] sm:$0xf]
    %v78 = vld [vmem:[%s3] sm:$0x1]
    %v79 = vlaneseq
    %v80 = vshrl.u32 %v79, 7
    %v81 = vsub.s32 0, %v80
    %v82 = vrot.slane %v78, %v81
    %v87 = vunpack.c.l.b16 %v74
    %v88 = vunpack.c.l.b16 %v75
    %v89 = vunpack.c.l.b16 %v76
    %v90 = vunpack.c.l.b16 %v77
    %v91 = vpack.c.b16 %v88, %v87
    %v92 = vpack.c.b16 %v90, %v89
    %vm95 = vcmask 261120
    %v97 = vsel %vm95, %v58, 0
    %v100 = vsel %vm95, %v59, 0
    %v103 = vsel %vm95, %v60, 0
    %v106 = vsel %vm95, %v61, 0
    %v109 = vsel %vm95, %v62, 0
    %v112 = vsel %vm95, %v63, 0
    %v115 = vsel %vm95, %v64, 0
    %v118 = vsel %vm95, %v65, 0
    %v121 = vsel %vm95, %v66, 0
    %v124 = vsel %vm95, %v67, 0
    %v127 = vsel %vm95, %v68, 0
    %v130 = vsel %vm95, %v69, 0
    %v133 = vsel %vm95, %v70, 0
    %v136 = vsel %vm95, %v71, 0
    %v139 = vsel %vm95, %v72, 0
    %v142 = vsel %vm95, %v73, 0
    %144 = vmatprep.subr.bf16.mxu0 0
    %145 = vmatpush1.bf16.msra.mxu0 %v91
    %146 = vmatprep.subr.bf16.mxu0 0
    %147 = vmatpush1.bf16.msra.mxu0 %v92
    %148 = vmatprep.subr.bf16.mxu0 0
    %149 = vmatpush1.bf16.msra.mxu0 0
    %150 = vmatprep.subr.bf16.mxu0 0
    %151 = vmatpush1.bf16.msra.mxu0 0
    %152 = vmatprep.subr.bf16.mxu0 0
    %153 = vmatpush1.bf16.msra.mxu0 0
    %154 = vmatprep.subr.bf16.mxu0 0
    %155 = vmatpush1.bf16.msra.mxu0 0
    %156 = vmatprep.subr.bf16.mxu0 0
    %157 = vmatpush1.bf16.msra.mxu0 0
    %158 = vmatprep.subr.bf16.mxu0 0
    %159 = vmatpush1.bf16.msra.mxu0 0
    %160 = vmatprep.subr.bf16.mxu0 0
    %161 = vmatpush1.bf16.msra.mxu0 0
    %162 = vmatprep.subr.bf16.mxu0 0
    %163 = vmatpush1.bf16.msra.mxu0 0
    %164 = vmatprep.subr.bf16.mxu0 0
    %165 = vmatpush1.bf16.msra.mxu0 0
    %166 = vmatprep.subr.bf16.mxu0 0
    %167 = vmatpush1.bf16.msra.mxu0 0
    %168 = vmatprep.subr.bf16.mxu0 0
    %169 = vmatpush1.bf16.msra.mxu0 0
    %170 = vmatprep.subr.bf16.mxu0 0
    %171 = vmatpush1.bf16.msra.mxu0 0
    %172 = vmatprep.subr.bf16.mxu0 0
    %173 = vmatpush1.bf16.msra.mxu0 0
    %174 = vmatprep.subr.bf16.mxu0 0
    %175 = vmatpush1.bf16.msra.mxu0 0
    %176 = vmatprep.mubr.bf16.mxu0 0
    %177 = vmatmul.mubr.bf16.gmra.mrb[0].mxu0 %v97
    %v178 = vpop.f32.mrb[0].mxu0
    %v179 = vadd.f32 %v82, %v178
    %v180 = vpop.f32.mrb[0].mxu0
    %v181 = vpop.f32.mrb[0].mxu0
    %v182 = vadd.f32 %v82, %v181
    %v183 = vpop.f32.mrb[0].mxu0
    %184 = vmatprep.mubr.bf16.mxu0 0
    %185 = vmatmul.mubr.bf16.gmra.mrb[0].mxu0 %v100
    %v186 = vpop.f32.mrb[0].mxu0
    %v187 = vadd.f32 %v82, %v186
    %v188 = vpop.f32.mrb[0].mxu0
    %v189 = vpop.f32.mrb[0].mxu0
    %v190 = vadd.f32 %v82, %v189
    %v191 = vpop.f32.mrb[0].mxu0
    %192 = vmatprep.mubr.bf16.mxu0 0
    %193 = vmatmul.mubr.bf16.gmra.mrb[0].mxu0 %v103
    %v194 = vpop.f32.mrb[0].mxu0
    %v195 = vadd.f32 %v82, %v194
    %v196 = vpop.f32.mrb[0].mxu0
    %v197 = vpop.f32.mrb[0].mxu0
    %v198 = vadd.f32 %v82, %v197
    %v199 = vpop.f32.mrb[0].mxu0
    %200 = vmatprep.mubr.bf16.mxu0 0
    %201 = vmatmul.mubr.bf16.gmra.mrb[0].mxu0 %v106
    %v202 = vpop.f32.mrb[0].mxu0
    %v203 = vadd.f32 %v82, %v202
    %v204 = vpop.f32.mrb[0].mxu0
    %v205 = vpop.f32.mrb[0].mxu0
    %v206 = vadd.f32 %v82, %v205
    %v207 = vpop.f32.mrb[0].mxu0
    %208 = vmatprep.mubr.bf16.mxu0 0
    %209 = vmatmul.mubr.bf16.gmra.mrb[0].mxu0 %v109
    %v210 = vpop.f32.mrb[0].mxu0
    %v211 = vadd.f32 %v82, %v210
    %v212 = vpop.f32.mrb[0].mxu0
    %v213 = vpop.f32.mrb[0].mxu0
    %v214 = vadd.f32 %v82, %v213
    %v215 = vpop.f32.mrb[0].mxu0
    %216 = vmatprep.mubr.bf16.mxu0 0
    %217 = vmatmul.mubr.bf16.gmra.mrb[0].mxu0 %v112
    %v218 = vpop.f32.mrb[0].mxu0
    %v219 = vadd.f32 %v82, %v218
    %v220 = vpop.f32.mrb[0].mxu0
    %v221 = vpop.f32.mrb[0].mxu0
    %v222 = vadd.f32 %v82, %v221
    %v223 = vpop.f32.mrb[0].mxu0
    %224 = vmatprep.mubr.bf16.mxu0 0
    %225 = vmatmul.mubr.bf16.gmra.mrb[0].mxu0 %v115
    %v226 = vpop.f32.mrb[0].mxu0
    %v227 = vadd.f32 %v82, %v226
    %v228 = vpop.f32.mrb[0].mxu0
    %v229 = vpop.f32.mrb[0].mxu0
    %v230 = vadd.f32 %v82, %v229
    %v231 = vpop.f32.mrb[0].mxu0
    %232 = vmatprep.mubr.bf16.mxu0 0
    %233 = vmatmul.mubr.bf16.gmra.mrb[0].mxu0 %v118
    %v234 = vpop.f32.mrb[0].mxu0
    %v235 = vadd.f32 %v82, %v234
    %v236 = vpop.f32.mrb[0].mxu0
    %v237 = vpop.f32.mrb[0].mxu0
    %v238 = vadd.f32 %v82, %v237
    %v239 = vpop.f32.mrb[0].mxu0
    %240 = vmatprep.mubr.bf16.mxu0 0
    %241 = vmatmul.mubr.bf16.gmra.mrb[0].mxu0 %v121
    %v242 = vpop.f32.mrb[0].mxu0
    %v243 = vadd.f32 %v82, %v242
    %v244 = vpop.f32.mrb[0].mxu0
    %v245 = vpop.f32.mrb[0].mxu0
    %v246 = vadd.f32 %v82, %v245
    %v247 = vpop.f32.mrb[0].mxu0
    %248 = vmatprep.mubr.bf16.mxu0 0
    %249 = vmatmul.mubr.bf16.gmra.mrb[0].mxu0 %v124
    %v250 = vpop.f32.mrb[0].mxu0
    %v251 = vadd.f32 %v82, %v250
    %v252 = vpop.f32.mrb[0].mxu0
    %v253 = vpop.f32.mrb[0].mxu0
    %v254 = vadd.f32 %v82, %v253
    %v255 = vpop.f32.mrb[0].mxu0
    %256 = vmatprep.mubr.bf16.mxu0 0
    %257 = vmatmul.mubr.bf16.gmra.mrb[0].mxu0 %v127
    %v258 = vpop.f32.mrb[0].mxu0
    %v259 = vadd.f32 %v82, %v258
    %v260 = vpop.f32.mrb[0].mxu0
    %v261 = vpop.f32.mrb[0].mxu0
    %v262 = vadd.f32 %v82, %v261
    %v263 = vpop.f32.mrb[0].mxu0
    %264 = vmatprep.mubr.bf16.mxu0 0
    %265 = vmatmul.mubr.bf16.gmra.mrb[0].mxu0 %v130
    %v266 = vpop.f32.mrb[0].mxu0
    %v267 = vadd.f32 %v82, %v266
    %v268 = vpop.f32.mrb[0].mxu0
    %v269 = vpop.f32.mrb[0].mxu0
    %v270 = vadd.f32 %v82, %v269
    %v271 = vpop.f32.mrb[0].mxu0
    %272 = vmatprep.mubr.bf16.mxu0 0
    %273 = vmatmul.mubr.bf16.gmra.mrb[0].mxu0 %v133
    %v274 = vpop.f32.mrb[0].mxu0
    %v275 = vadd.f32 %v82, %v274
    %v276 = vpop.f32.mrb[0].mxu0
    %v277 = vpop.f32.mrb[0].mxu0
    %v278 = vadd.f32 %v82, %v277
    %v279 = vpop.f32.mrb[0].mxu0
    %280 = vmatprep.mubr.bf16.mxu0 0
    %281 = vmatmul.mubr.bf16.gmra.mrb[0].mxu0 %v136
    %v282 = vpop.f32.mrb[0].mxu0
    %v283 = vadd.f32 %v82, %v282
    %v284 = vpop.f32.mrb[0].mxu0
    %v285 = vpop.f32.mrb[0].mxu0
    %v286 = vadd.f32 %v82, %v285
    %v287 = vpop.f32.mrb[0].mxu0
    %288 = vmatprep.mubr.bf16.mxu0 0
    %289 = vmatmul.mubr.bf16.gmra.mrb[0].mxu0 %v139
    %v290 = vpop.f32.mrb[0].mxu0
    %v291 = vadd.f32 %v82, %v290
    %v292 = vpop.f32.mrb[0].mxu0
    %v293 = vpop.f32.mrb[0].mxu0
    %v294 = vadd.f32 %v82, %v293
    %v295 = vpop.f32.mrb[0].mxu0
    %296 = vmatprep.mubr.bf16.mxu0 0
    %297 = vmatmul.mubr.bf16.gmra.mrb[0].mxu0 %v142
    %v298 = vpop.f32.mrb[0].mxu0
    %v299 = vadd.f32 %v82, %v298
    %v300 = vpop.f32.mrb[0].mxu0
    %v301 = vpop.f32.mrb[0].mxu0
    %v302 = vadd.f32 %v82, %v301
    %v303 = vpop.f32.mrb[0].mxu0
    %304 = vdwg.mxu0
    %v305 = vmax.f32 %v179, 0.0
    %v306 = vmax.f32 %v182, 0.0
    %v307 = vmax.f32 %v187, 0.0
    %v308 = vmax.f32 %v190, 0.0
    %v309 = vmax.f32 %v195, 0.0
    %v310 = vmax.f32 %v198, 0.0
    %v311 = vmax.f32 %v203, 0.0
    %v312 = vmax.f32 %v206, 0.0
    %v313 = vmax.f32 %v211, 0.0
    %v314 = vmax.f32 %v214, 0.0
    %v315 = vmax.f32 %v219, 0.0
    %v316 = vmax.f32 %v222, 0.0
    %v317 = vmax.f32 %v227, 0.0
    %v318 = vmax.f32 %v230, 0.0
    %v319 = vmax.f32 %v235, 0.0
    %v320 = vmax.f32 %v238, 0.0
    %v321 = vmax.f32 %v243, 0.0
    %v322 = vmax.f32 %v246, 0.0
    %v323 = vmax.f32 %v251, 0.0
    %v324 = vmax.f32 %v254, 0.0
    %v325 = vmax.f32 %v259, 0.0
    %v326 = vmax.f32 %v262, 0.0
    %v327 = vmax.f32 %v267, 0.0
    %v328 = vmax.f32 %v270, 0.0
    %v329 = vmax.f32 %v275, 0.0
    %v330 = vmax.f32 %v278, 0.0
    %v331 = vmax.f32 %v283, 0.0
    %v332 = vmax.f32 %v286, 0.0
    %v333 = vmax.f32 %v291, 0.0
    %v334 = vmax.f32 %v294, 0.0
    %v335 = vmax.f32 %v299, 0.0
    %v336 = vmax.f32 %v302, 0.0
    %v337 = vpack.c.bf16 %v306, %v305
    %v338 = vpack.c.bf16 %v308, %v307
    %v339 = vpack.c.bf16 %v310, %v309
    %v340 = vpack.c.bf16 %v312, %v311
    %v341 = vpack.c.bf16 %v314, %v313
    %v342 = vpack.c.bf16 %v316, %v315
    %v343 = vpack.c.bf16 %v318, %v317
    %v344 = vpack.c.bf16 %v320, %v319
    %v345 = vpack.c.bf16 %v322, %v321
    %v346 = vpack.c.bf16 %v324, %v323
    %v347 = vpack.c.bf16 %v326, %v325
    %v348 = vpack.c.bf16 %v328, %v327
    %v349 = vpack.c.bf16 %v330, %v329
    %v350 = vpack.c.bf16 %v332, %v331
    %v351 = vpack.c.bf16 %v334, %v333
    %v352 = vpack.c.bf16 %v336, %v335
    %v353 = vld [vmem:[%s2] sm:$0xf]
    %v354 = vld [vmem:[%s2 + $0x4] sm:$0xf]
    %v355 = vld [vmem:[%s2 + $0x8] sm:$0xf]
    %v356 = vld [vmem:[%s2 + $0xc] sm:$0xf]
    %v357 = vld [vmem:[%s2 + $0x10] sm:$0xf]
    %v358 = vld [vmem:[%s2 + $0x14] sm:$0xf]
    %v359 = vld [vmem:[%s2 + $0x18] sm:$0xf]
    %v360 = vld [vmem:[%s2 + $0x1c] sm:$0xf]
    %v361 = vld [vmem:[%s2 + $0x20] sm:$0xf]
    %v362 = vld [vmem:[%s2 + $0x24] sm:$0xf]
    %v363 = vld [vmem:[%s2 + $0x28] sm:$0xf]
    %v364 = vld [vmem:[%s2 + $0x2c] sm:$0xf]
    %v365 = vld [vmem:[%s2 + $0x30] sm:$0xf]
    %v366 = vld [vmem:[%s2 + $0x34] sm:$0xf]
    %v367 = vld [vmem:[%s2 + $0x38] sm:$0xf]
    %v368 = vld [vmem:[%s2 + $0x3c] sm:$0xf]
    %v369 = vld [vmem:[%s3 + $0x1] sm:$0x1]
    %v370 = vlaneseq
    %v371 = vshrl.u32 %v370, 7
    %v372 = vsub.s32 0, %v371
    %v373 = vrot.slane %v369, %v372
    %v390 = vunpack.c.l.b16 %v353
    %v391 = vunpack.c.l.b16 %v354
    %v392 = vunpack.c.l.b16 %v355
    %v393 = vunpack.c.l.b16 %v356
    %v394 = vunpack.c.l.b16 %v357
    %v395 = vunpack.c.l.b16 %v358
    %v396 = vunpack.c.l.b16 %v359
    %v397 = vunpack.c.l.b16 %v360
    %v398 = vunpack.c.l.b16 %v361
    %v399 = vunpack.c.l.b16 %v362
    %v400 = vunpack.c.l.b16 %v363
    %v401 = vunpack.c.l.b16 %v364
    %v402 = vunpack.c.l.b16 %v365
    %v403 = vunpack.c.l.b16 %v366
    %v404 = vunpack.c.l.b16 %v367
    %v405 = vunpack.c.l.b16 %v368
    %v406 = vpack.c.b16 %v391, %v390
    %v407 = vpack.c.b16 %v393, %v392
    %v408 = vpack.c.b16 %v395, %v394
    %v409 = vpack.c.b16 %v397, %v396
    %v410 = vpack.c.b16 %v399, %v398
    %v411 = vpack.c.b16 %v401, %v400
    %v412 = vpack.c.b16 %v403, %v402
    %v413 = vpack.c.b16 %v405, %v404
    %422 = vmatprep.subr.bf16.mxu0 0
    %423 = vmatpush1.bf16.msra.mxu0 %v406
    %424 = vmatprep.subr.bf16.mxu0 0
    %425 = vmatpush1.bf16.msra.mxu0 %v407
    %426 = vmatprep.subr.bf16.mxu0 0
    %427 = vmatpush1.bf16.msra.mxu0 %v408
    %428 = vmatprep.subr.bf16.mxu0 0
    %429 = vmatpush1.bf16.msra.mxu0 %v409
    %430 = vmatprep.subr.bf16.mxu0 0
    %431 = vmatpush1.bf16.msra.mxu0 %v410
    %432 = vmatprep.subr.bf16.mxu0 0
    %433 = vmatpush1.bf16.msra.mxu0 %v411
    %434 = vmatprep.subr.bf16.mxu0 0
    %435 = vmatpush1.bf16.msra.mxu0 %v412
    %436 = vmatprep.subr.bf16.mxu0 0
    %437 = vmatpush1.bf16.msra.mxu0 %v413
    %438 = vmatprep.subr.bf16.mxu0 0
    %439 = vmatpush1.bf16.msra.mxu0 0
    %440 = vmatprep.subr.bf16.mxu0 0
    %441 = vmatpush1.bf16.msra.mxu0 0
    %442 = vmatprep.subr.bf16.mxu0 0
    %443 = vmatpush1.bf16.msra.mxu0 0
    %444 = vmatprep.subr.bf16.mxu0 0
    %445 = vmatpush1.bf16.msra.mxu0 0
    %446 = vmatprep.subr.bf16.mxu0 0
    %447 = vmatpush1.bf16.msra.mxu0 0
    %448 = vmatprep.subr.bf16.mxu0 0
    %449 = vmatpush1.bf16.msra.mxu0 0
    %450 = vmatprep.subr.bf16.mxu0 0
    %451 = vmatpush1.bf16.msra.mxu0 0
    %452 = vmatprep.subr.bf16.mxu0 0
    %453 = vmatpush1.bf16.msra.mxu0 0
    %454 = vmatprep.mubr.bf16.mxu0 0
    %455 = vmatmul.mubr.bf16.gmra.mrb[0].mxu0 %v337
    %v456 = vpop.f32.mrb[0].mxu0
    %v457 = vadd.f32 %v373, %v456
    %v458 = vpop.f32.mrb[0].mxu0
    %v459 = vpop.f32.mrb[0].mxu0
    %v460 = vadd.f32 %v373, %v459
    %v461 = vpop.f32.mrb[0].mxu0
    %462 = vmatprep.mubr.bf16.mxu0 0
    %463 = vmatmul.mubr.bf16.gmra.mrb[0].mxu0 %v338
    %v464 = vpop.f32.mrb[0].mxu0
    %v465 = vadd.f32 %v373, %v464
    %v466 = vpop.f32.mrb[0].mxu0
    %v467 = vpop.f32.mrb[0].mxu0
    %v468 = vadd.f32 %v373, %v467
    %v469 = vpop.f32.mrb[0].mxu0
    %470 = vmatprep.mubr.bf16.mxu0 0
    %471 = vmatmul.mubr.bf16.gmra.mrb[0].mxu0 %v339
    %v472 = vpop.f32.mrb[0].mxu0
    %v473 = vadd.f32 %v373, %v472
    %v474 = vpop.f32.mrb[0].mxu0
    %v475 = vpop.f32.mrb[0].mxu0
    %v476 = vadd.f32 %v373, %v475
    %v477 = vpop.f32.mrb[0].mxu0
    %478 = vmatprep.mubr.bf16.mxu0 0
    %479 = vmatmul.mubr.bf16.gmra.mrb[0].mxu0 %v340
    %v480 = vpop.f32.mrb[0].mxu0
    %v481 = vadd.f32 %v373, %v480
    %v482 = vpop.f32.mrb[0].mxu0
    %v483 = vpop.f32.mrb[0].mxu0
    %v484 = vadd.f32 %v373, %v483
    %v485 = vpop.f32.mrb[0].mxu0
    %486 = vmatprep.mubr.bf16.mxu0 0
    %487 = vmatmul.mubr.bf16.gmra.mrb[0].mxu0 %v341
    %v488 = vpop.f32.mrb[0].mxu0
    %v489 = vadd.f32 %v373, %v488
    %v490 = vpop.f32.mrb[0].mxu0
    %v491 = vpop.f32.mrb[0].mxu0
    %v492 = vadd.f32 %v373, %v491
    %v493 = vpop.f32.mrb[0].mxu0
    %494 = vmatprep.mubr.bf16.mxu0 0
    %495 = vmatmul.mubr.bf16.gmra.mrb[0].mxu0 %v342
    %v496 = vpop.f32.mrb[0].mxu0
    %v497 = vadd.f32 %v373, %v496
    %v498 = vpop.f32.mrb[0].mxu0
    %v499 = vpop.f32.mrb[0].mxu0
    %v500 = vadd.f32 %v373, %v499
    %v501 = vpop.f32.mrb[0].mxu0
    %502 = vmatprep.mubr.bf16.mxu0 0
    %503 = vmatmul.mubr.bf16.gmra.mrb[0].mxu0 %v343
    %v504 = vpop.f32.mrb[0].mxu0
    %v505 = vadd.f32 %v373, %v504
    %v506 = vpop.f32.mrb[0].mxu0
    %v507 = vpop.f32.mrb[0].mxu0
    %v508 = vadd.f32 %v373, %v507
    %v509 = vpop.f32.mrb[0].mxu0
    %510 = vmatprep.mubr.bf16.mxu0 0
    %511 = vmatmul.mubr.bf16.gmra.mrb[0].mxu0 %v344
    %v512 = vpop.f32.mrb[0].mxu0
    %v513 = vadd.f32 %v373, %v512
    %v514 = vpop.f32.mrb[0].mxu0
    %v515 = vpop.f32.mrb[0].mxu0
    %v516 = vadd.f32 %v373, %v515
    %v517 = vpop.f32.mrb[0].mxu0
    %518 = vmatprep.mubr.bf16.mxu0 0
    %519 = vmatmul.mubr.bf16.gmra.mrb[0].mxu0 %v345
    %v520 = vpop.f32.mrb[0].mxu0
    %v521 = vadd.f32 %v373, %v520
    %v522 = vpop.f32.mrb[0].mxu0
    %v523 = vpop.f32.mrb[0].mxu0
    %v524 = vadd.f32 %v373, %v523
    %v525 = vpop.f32.mrb[0].mxu0
    %526 = vmatprep.mubr.bf16.mxu0 0
    %527 = vmatmul.mubr.bf16.gmra.mrb[0].mxu0 %v346
    %v528 = vpop.f32.mrb[0].mxu0
    %v529 = vadd.f32 %v373, %v528
    %v530 = vpop.f32.mrb[0].mxu0
    %v531 = vpop.f32.mrb[0].mxu0
    %v532 = vadd.f32 %v373, %v531
    %v533 = vpop.f32.mrb[0].mxu0
    %534 = vmatprep.mubr.bf16.mxu0 0
    %535 = vmatmul.mubr.bf16.gmra.mrb[0].mxu0 %v347
    %v536 = vpop.f32.mrb[0].mxu0
    %v537 = vadd.f32 %v373, %v536
    %v538 = vpop.f32.mrb[0].mxu0
    %v539 = vpop.f32.mrb[0].mxu0
    %v540 = vadd.f32 %v373, %v539
    %v541 = vpop.f32.mrb[0].mxu0
    %542 = vmatprep.mubr.bf16.mxu0 0
    %543 = vmatmul.mubr.bf16.gmra.mrb[0].mxu0 %v348
    %v544 = vpop.f32.mrb[0].mxu0
    %v545 = vadd.f32 %v373, %v544
    %v546 = vpop.f32.mrb[0].mxu0
    %v547 = vpop.f32.mrb[0].mxu0
    %v548 = vadd.f32 %v373, %v547
    %v549 = vpop.f32.mrb[0].mxu0
    %550 = vmatprep.mubr.bf16.mxu0 0
    %551 = vmatmul.mubr.bf16.gmra.mrb[0].mxu0 %v349
    %v552 = vpop.f32.mrb[0].mxu0
    %v553 = vadd.f32 %v373, %v552
    %v554 = vpop.f32.mrb[0].mxu0
    %v555 = vpop.f32.mrb[0].mxu0
    %v556 = vadd.f32 %v373, %v555
    %v557 = vpop.f32.mrb[0].mxu0
    %558 = vmatprep.mubr.bf16.mxu0 0
    %559 = vmatmul.mubr.bf16.gmra.mrb[0].mxu0 %v350
    %v560 = vpop.f32.mrb[0].mxu0
    %v561 = vadd.f32 %v373, %v560
    %v562 = vpop.f32.mrb[0].mxu0
    %v563 = vpop.f32.mrb[0].mxu0
    %v564 = vadd.f32 %v373, %v563
    %v565 = vpop.f32.mrb[0].mxu0
    %566 = vmatprep.mubr.bf16.mxu0 0
    %567 = vmatmul.mubr.bf16.gmra.mrb[0].mxu0 %v351
    %v568 = vpop.f32.mrb[0].mxu0
    %v569 = vadd.f32 %v373, %v568
    %v570 = vpop.f32.mrb[0].mxu0
    %v571 = vpop.f32.mrb[0].mxu0
    %v572 = vadd.f32 %v373, %v571
    %v573 = vpop.f32.mrb[0].mxu0
    %574 = vmatprep.mubr.bf16.mxu0 0
    %575 = vmatmul.mubr.bf16.gmra.mrb[0].mxu0 %v352
    %v576 = vpop.f32.mrb[0].mxu0
    %v577 = vadd.f32 %v373, %v576
    %v578 = vpop.f32.mrb[0].mxu0
    %v579 = vpop.f32.mrb[0].mxu0
    %v580 = vadd.f32 %v373, %v579
    %v581 = vpop.f32.mrb[0].mxu0
    %582 = vdwg.mxu0
    %v583 = vmax.f32 %v457, 0.0
    %v584 = vmax.f32 %v460, 0.0
    %v585 = vmax.f32 %v465, 0.0
    %v586 = vmax.f32 %v468, 0.0
    %v587 = vmax.f32 %v473, 0.0
    %v588 = vmax.f32 %v476, 0.0
    %v589 = vmax.f32 %v481, 0.0
    %v590 = vmax.f32 %v484, 0.0
    %v591 = vmax.f32 %v489, 0.0
    %v592 = vmax.f32 %v492, 0.0
    %v593 = vmax.f32 %v497, 0.0
    %v594 = vmax.f32 %v500, 0.0
    %v595 = vmax.f32 %v505, 0.0
    %v596 = vmax.f32 %v508, 0.0
    %v597 = vmax.f32 %v513, 0.0
    %v598 = vmax.f32 %v516, 0.0
    %v599 = vmax.f32 %v521, 0.0
    %v600 = vmax.f32 %v524, 0.0
    %v601 = vmax.f32 %v529, 0.0
    %v602 = vmax.f32 %v532, 0.0
    %v603 = vmax.f32 %v537, 0.0
    %v604 = vmax.f32 %v540, 0.0
    %v605 = vmax.f32 %v545, 0.0
    %v606 = vmax.f32 %v548, 0.0
    %v607 = vmax.f32 %v553, 0.0
    %v608 = vmax.f32 %v556, 0.0
    %v609 = vmax.f32 %v561, 0.0
    %v610 = vmax.f32 %v564, 0.0
    %v611 = vmax.f32 %v569, 0.0
    %v612 = vmax.f32 %v572, 0.0
    %v613 = vmax.f32 %v577, 0.0
    %v614 = vmax.f32 %v580, 0.0
    %v615 = vld [vmem:[%s4] sm:$0x1]
    %s616 = sld [smem:[#allocation2]]
    %v617 = vstv %s616
    %618 = vmatprep.subr.mxu0 0.0
    %619 = vmatpush1.xpose.msra.mxu0 %v583
    %620 = vmatprep.subr.mxu0 0.0
    %621 = vmatpush1.xpose.msra.mxu0 %v584
    %622 = vmatprep.subr.mxu0 0.0
    %623 = vmatpush1.xpose.msra.mxu0 %v585
    %624 = vmatprep.subr.mxu0 0.0
    %625 = vmatpush1.xpose.msra.mxu0 %v586
    %626 = vmatprep.subr.mxu0 0.0
    %627 = vmatpush1.xpose.msra.mxu0 %v587
    %628 = vmatprep.subr.mxu0 0.0
    %629 = vmatpush1.xpose.msra.mxu0 %v588
    %630 = vmatprep.subr.mxu0 0.0
    %631 = vmatpush1.xpose.msra.mxu0 %v589
    %632 = vmatprep.subr.mxu0 0.0
    %633 = vmatpush1.xpose.msra.mxu0 %v590
    %634 = vmatprep.subr.mxu0 0.0
    %635 = vmatpush1.xpose.msra.mxu0 %v591
    %636 = vmatprep.subr.mxu0 0.0
    %637 = vmatpush1.xpose.msra.mxu0 %v592
    %638 = vmatprep.subr.mxu0 0.0
    %639 = vmatpush1.xpose.msra.mxu0 %v593
    %640 = vmatprep.subr.mxu0 0.0
    %641 = vmatpush1.xpose.msra.mxu0 %v594
    %642 = vmatprep.subr.mxu0 0.0
    %643 = vmatpush1.xpose.msra.mxu0 %v595
    %644 = vmatprep.subr.mxu0 0.0
    %645 = vmatpush1.xpose.msra.mxu0 %v596
    %646 = vmatprep.subr.mxu0 0.0
    %647 = vmatpush1.xpose.msra.mxu0 %v597
    %648 = vmatprep.subr.mxu0 0.0
    %649 = vmatpush1.xpose.msra.mxu0 %v598
    %650 = vmatprep.subr.mxu0 0.0
    %651 = vmatpush1.xpose.msra.mxu0 %v599
    %652 = vmatprep.subr.mxu0 0.0
    %653 = vmatpush1.xpose.msra.mxu0 %v600
    %654 = vmatprep.subr.mxu0 0.0
    %655 = vmatpush1.xpose.msra.mxu0 %v601
    %656 = vmatprep.subr.mxu0 0.0
    %657 = vmatpush1.xpose.msra.mxu0 %v602
    %658 = vmatprep.subr.mxu0 0.0
    %659 = vmatpush1.xpose.msra.mxu0 %v603
    %660 = vmatprep.subr.mxu0 0.0
    %661 = vmatpush1.xpose.msra.mxu0 %v604
    %662 = vmatprep.subr.mxu0 0.0
    %663 = vmatpush1.xpose.msra.mxu0 %v605
    %664 = vmatprep.subr.mxu0 0.0
    %665 = vmatpush1.xpose.msra.mxu0 %v606
    %666 = vmatprep.subr.mxu0 0.0
    %667 = vmatpush1.xpose.msra.mxu0 %v607
    %668 = vmatprep.subr.mxu0 0.0
    %669 = vmatpush1.xpose.msra.mxu0 %v608
    %670 = vmatprep.subr.mxu0 0.0
    %671 = vmatpush1.xpose.msra.mxu0 %v609
    %672 = vmatprep.subr.mxu0 0.0
    %673 = vmatpush1.xpose.msra.mxu0 %v610
    %674 = vmatprep.subr.mxu0 0.0
    %675 = vmatpush1.xpose.msra.mxu0 %v611
    %676 = vmatprep.subr.mxu0 0.0
    %677 = vmatpush1.xpose.msra.mxu0 %v612
    %678 = vmatprep.subr.mxu0 0.0
    %679 = vmatpush1.xpose.msra.mxu0 %v613
    %680 = vmatprep.subr.mxu0 0.0
    %681 = vmatpush1.xpose.msra.mxu0 %v614
    %682 = vmatprep.mubr.f32.mxu0 0.0
    %683 = vmatmul.mubr.f32.gmra.mrb[0].mxu0 %v615
    %v684 = vpop.f32.mrb[0].mxu0
    %v685 = vadd.f32 %v617, %v684
    %v686 = vpop.f32.mrb[0].mxu0
    %v687 = vadd.f32 %v617, %v686
    %688 = vdwg.mxu0
    %v691 = vcombine.low %v685, %v687
    %v693 = vunpack.c.l.s4 1966171168
    %v694 = vunpack.c.0.s8 %v693
    %v695 = vlaneseq
    %v696 = vshrl.u32 %v695, 7
    %v697 = vsub.s32 %v694, %v696
    %v698 = vrot.slane %v691, %v697
    %v700 = vunpack.c.l.s4 1966171168
    %v701 = vunpack.c.0.s8 %v700
    %v702 = vlaneseq
    %v703 = vshrl.u32 %v702, 7
    %v704 = vsub.s32 %v701, %v703
    %v705 = vrot.slane %v698, %v704
    %v707 = vlaneseq
    %vm708 = vcmp.ge.s32.totalorder %v707, 0
    %vm709 = vcmp.lt.s32.totalorder %v707, 256
    %vm710 = vmand %vm708, %vm709
    %711 = vst.msk [vmem:[#allocation3] sm:$0x3] %vm710, %v705
    // Predicated region
    $region26: #{tpu_custom_call.1} parent=1 // pred_check
      _
    $region27: #{tpu_custom_call.1} parent=1 // pred_check_branch
      %713 = sbr.rel (0) target = $region29
    $region28: #{tpu_custom_call.1} parent=1 // pred_region
      %s715 = ssub.s32 32, 32
      %716 = vsyncadd [#allocation4], %s715
      %s718 = sshll.u32 [#allocation3], 4
      %s719 = int_to_ptr.vmem [resolvable:$true] %s718
      %721 = dma.vmem_to_hbm [thread:$0]  %s719, 32, %s6, [#allocation4]
    $region29: #{tpu_custom_call.1} parent=1 // pred_fallthru
      _
    // Predicated region
    $region30: #{tpu_custom_call.1} parent=1 // pred_check
      _
    $region31: #{tpu_custom_call.1} parent=1 // pred_check_branch
      %723 = sbr.rel (0) target = $region33
    $region32: #{tpu_custom_call.1} parent=1 // pred_region
      %724 = dma.done [#allocation4], 32
    $region33: #{tpu_custom_call.1} parent=1 // pred_fallthru
      _
    %725 = vsyncpa [#allocation4], 1

</llo_original>
